<compile_context>
chip_gen: v5e
topology: v5e:2x2
jax: 0.10.0
libtpu: 0.0.40
codegen_flags: <defaults>
</compile_context>

<pallas_src>
import functools
import math

import jax
import jax.numpy as jnp
from jax.experimental import pallas as pl
from jax.experimental.pallas import tpu as pltpu

_MIB = 1024 * 1024


def _round_up(x, m):
    return ((x + m - 1) // m) * m


def _vmem_capacity_bytes():
    """Physical per-core VMEM, with a conservative fallback (v7x = 64 MiB)."""
    try:
        info = pltpu.get_tpu_info()
        cap = getattr(info, "vmem_capacity_bytes", None)
        if cap:
            return int(cap)
    except Exception:
        pass
    return 64 * _MIB


# ---------------------------------------------------------------------------
# Pass 1: fused Q/K/V projection (1x1 conv == per-token linear).
# ---------------------------------------------------------------------------
def _qkv_proj_kernel(x_ref, w_ref, b_ref, q_ref, k_ref, v_ref, *, cqp):
    """x_ref (1,Tp,Cp) f32; w_ref (Cp, 2*Cqp+Cp) bf16 = [Wq^T|Wk^T|Wv^T]; b_ref f32."""
    x = x_ref[0].astype(jnp.bfloat16)                                       # (Tp, Cp)
    qkv = jnp.dot(x, w_ref[...], preferred_element_type=jnp.float32)        # (Tp, Ctot)
    qkv = (qkv + b_ref[...]).astype(jnp.bfloat16)
    q_ref[0] = qkv[:, :cqp]
    k_ref[0] = qkv[:, cqp:2 * cqp]
    v_ref[0] = qkv[:, 2 * cqp:]


# ---------------------------------------------------------------------------
# Pass 2a: attention with the whole key/value axis resident in VMEM (nk == 1).
# ---------------------------------------------------------------------------
def _attn_single_kv_kernel(x_ref, q_ref, k_ref, v_ref, kbias_ref, gamma_ref, out_ref,
                           *, apply_mask):
    s = jax.lax.dot_general(q_ref[0], k_ref[0], (((1,), (1,)), ((), ())),
                            preferred_element_type=jnp.float32)             # (Tq, Nk)
    if apply_mask:  # static: only when the token axis was padded
        s = s + kbias_ref[...]                                              # (1, Nk) bcast
    m = jnp.max(s, axis=-1, keepdims=True)
    p = jnp.exp(s - m)
    l = jnp.sum(p, axis=-1, keepdims=True)
    o = jnp.dot(p.astype(jnp.bfloat16), v_ref[0], preferred_element_type=jnp.float32)
    o = o * pl.reciprocal(l, approx=False)
    out_ref[0] = (gamma_ref[0, 0] * o + x_ref[0]).astype(out_ref.dtype)


# ---------------------------------------------------------------------------
# Pass 2b: flash-style online-softmax fallback for large N (grid = (B, nq, nk)).
# ---------------------------------------------------------------------------
def _attn_flash_kernel(x_ref, q_ref, k_ref, v_ref, kbias_ref, gamma_ref, out_ref,
                       m_sc, l_sc, acc_sc, *, apply_mask):
    ki = pl.program_id(2)
    nk = pl.num_programs(2)

    @pl.when(ki == 0)
    def _init():
        m_sc[...] = jnp.full(m_sc.shape, -jnp.inf, jnp.float32)
        l_sc[...] = jnp.zeros(l_sc.shape, jnp.float32)
        acc_sc[...] = jnp.zeros(acc_sc.shape, jnp.float32)

    s = jax.lax.dot_general(q_ref[0], k_ref[0], (((1,), (1,)), ((), ())),
                            preferred_element_type=jnp.float32)             # (Tq, Tk)
    if apply_mask:  # single broadcast add; bias row is 0 except on padded keys
        s = s + kbias_ref[...]

    m_prev = m_sc[...]
    m_new = jnp.maximum(m_prev, jnp.max(s, axis=-1, keepdims=True))
    alpha = jnp.exp(m_prev - m_new)
    p = jnp.exp(s - m_new)
    l_sc[...] = alpha * l_sc[...] + jnp.sum(p, axis=-1, keepdims=True)
    acc_sc[...] = alpha * acc_sc[...] + jnp.dot(
        p.astype(jnp.bfloat16), v_ref[0], preferred_element_type=jnp.float32)
    m_sc[...] = m_new

    @pl.when(ki == nk - 1)
    def _finalize():
        o = acc_sc[...] * pl.reciprocal(l_sc[...], approx=False)
        out_ref[0] = (gamma_ref[0, 0] * o + x_ref[0]).astype(out_ref.dtype)


# ---------------------------------------------------------------------------
# Wrapper.
# ---------------------------------------------------------------------------
def self_attn_pallas(x, wq, bq, wk, bk, wv, bv, gamma, *,
                     max_q_tile=256, max_kv_tokens=None):
    """x: (B, C, W, H) float32.  Returns (B, C, W, H).  Matches Self_Attn.forward."""
    B, C, W, H = x.shape
    N = W * H
    Cq = wq.shape[0]
    f32, bf16 = jnp.float32, jnp.bfloat16

    Cp = _round_up(C, 128)
    Cqp = _round_up(Cq, 128)
    Ctot = 2 * Cqp + Cp

    # ---- query tiling (keep >= 2 query tiles when B == 1 so both v7x TCs get work) ----
    Tq = min(_round_up(max_q_tile, 16), _round_up(N, 16))
    if B == 1 and _round_up(N, Tq) <= Tq and Tq > 16:
        Tq = _round_up((Tq + 1) // 2, 16)

    # ---- kv handling: whole-row softmax if it fits VMEM, flash tiles otherwise ----
    vmem_phys = _vmem_capacity_bytes()
    vmem_cap = max(int(vmem_phys * 0.6), 32 * _MIB)

    def attn_vmem_bytes(tq, tk, flash):
        blocks = (2 * tq * Cp * 4        # residual x (f32)
                  + 2 * tq * Cqp * 2     # Q
                  + 2 * tk * Cqp * 2     # K
                  + 2 * tk * Cp * 2      # V
                  + 2 * tk * 4           # key-pad bias
                  + 2 * tq * Cp * 4)     # output
        scratch = (2 * tq * 4 + tq * Cp * 4) if flash else 0
        temps = 3 * tq * tk * 4 + tq * tk * 2 + 2 * tq * Cp * 4
        return blocks + scratch + temps

    Np_single = _round_up(N, Tq)
    single_kv = ((max_kv_tokens is None or Np_single <= max_kv_tokens)
                 and int(1.5 * attn_vmem_bytes(Tq, Np_single, False)) <= vmem_cap)

    if single_kv:
        Np = Np_single
        Tk = Np
        nk = 1
    else:
        Tk = max_kv_tokens if max_kv_tokens is not None else 1024
        Tk = max(128, (min(Tk, 1024) // 128) * 128)       # kv tiles are 128-multiples
        while Tk > 128 and int(1.5 * attn_vmem_bytes(Tq, Tk, True)) > vmem_cap:
            Tk -= 128
        Np = _round_up(N, math.lcm(Tq, Tk))
        nk = Np // Tk
    nq = Np // Tq
    needs_mask = (Np != N)

    # ---- ONE tokens-major, zero-padded f32 copy of x (projection input + residual) ----
    xt = jnp.transpose(x.reshape(B, C, N).astype(f32), (0, 2, 1))
    xt = jnp.pad(xt, ((0, 0), (0, Np - N), (0, Cp - C)))                # (B, Np, Cp)

    # ---- fused projection operands: [Wq^T | Wk^T | Wv^T], zero-padded ----
    wq_t = jnp.pad(wq.astype(f32).T, ((0, Cp - C), (0, Cqp - Cq)))
    wk_t = jnp.pad(wk.astype(f32).T, ((0, Cp - C), (0, Cqp - Cq)))
    wv_t = jnp.pad(wv.astype(f32).T, ((0, Cp - C), (0, Cp - C)))
    w_qkv = jnp.concatenate([wq_t, wk_t, wv_t], axis=1).astype(bf16)    # (Cp, Ctot)
    b_qkv = jnp.concatenate([jnp.pad(bq.astype(f32), (0, Cqp - Cq)),
                             jnp.pad(bk.astype(f32), (0, Cqp - Cq)),
                             jnp.pad(bv.astype(f32), (0, Cp - C))]).reshape(1, Ctot)
    gamma_arr = jnp.asarray(gamma, f32).reshape(1, 1)

    # Additive key-padding bias: 0 for real tokens, -1e30 for padded tokens.
    kbias = jnp.where(jnp.arange(Np) < N, 0.0, -1e30).astype(f32).reshape(1, Np)

    # ------------------------------ pass 1: Q/K/V ------------------------------
    proj_est = (2 * Tq * Cp * 4 + 2 * Cp * Ctot * 2 + 2 * Ctot * 4
                + 2 * Tq * Ctot * 2 + 2 * Tq * Ctot * 4 + Tq * Cp * 2)
    proj_vmem = int(min(max(2 * proj_est, 16 * _MIB), vmem_cap))

    q_all, k_all, v_all = pl.pallas_call(
        functools.partial(_qkv_proj_kernel, cqp=Cqp),
        out_shape=(jax.ShapeDtypeStruct((B, Np, Cqp), bf16),
                   jax.ShapeDtypeStruct((B, Np, Cqp), bf16),
                   jax.ShapeDtypeStruct((B, Np, Cp), bf16)),
        grid_spec=pltpu.PrefetchScalarGridSpec(
            num_scalar_prefetch=0,
            grid=(B, Np // Tq),
            in_specs=[
                pl.BlockSpec((1, Tq, Cp), lambda b, t: (b, t, 0)),
                pl.BlockSpec((Cp, Ctot), lambda b, t: (0, 0)),
                pl.BlockSpec((1, Ctot), lambda b, t: (0, 0)),
            ],
            out_specs=[
                pl.BlockSpec((1, Tq, Cqp), lambda b, t: (b, t, 0)),
                pl.BlockSpec((1, Tq, Cqp), lambda b, t: (b, t, 0)),
                pl.BlockSpec((1, Tq, Cp), lambda b, t: (b, t, 0)),
            ],
        ),
        compiler_params=pltpu.CompilerParams(
            dimension_semantics=("parallel", "parallel"),
            vmem_limit_bytes=proj_vmem,
        ),
    )(xt, w_qkv, b_qkv)

    # ------------------------------ pass 2: attention ------------------------------
    attn_est = attn_vmem_bytes(Tq, Tk, not single_kv)
    attn_vmem = int(min(max(2 * attn_est, 16 * _MIB), vmem_cap))

    if single_kv:
        kernel = functools.partial(_attn_single_kv_kernel, apply_mask=needs_mask)
        grid = (B, nq)
        in_specs = [
            pl.BlockSpec((1, Tq, Cp), lambda b, qi: (b, qi, 0)),     # residual x (f32)
            pl.BlockSpec((1, Tq, Cqp), lambda b, qi: (b, qi, 0)),    # Q tile
            pl.BlockSpec((1, Np, Cqp), lambda b, qi: (b, 0, 0)),     # whole K
            pl.BlockSpec((1, Np, Cp), lambda b, qi: (b, 0, 0)),      # whole V
            pl.BlockSpec((1, Np), lambda b, qi: (0, 0)),             # key-pad bias
            pl.BlockSpec(memory_space=pltpu.MemorySpace.SMEM),       # gamma
        ]
        out_spec = pl.BlockSpec((1, Tq, Cp), lambda b, qi: (b, qi, 0))
        scratch = ()
        dims = ("parallel", "parallel")
    else:
        kernel = functools.partial(_attn_flash_kernel, apply_mask=needs_mask)
        grid = (B, nq, nk)
        in_specs = [
            pl.BlockSpec((1, Tq, Cp), lambda b, qi, ki: (b, qi, 0)),
            pl.BlockSpec((1, Tq, Cqp), lambda b, qi, ki: (b, qi, 0)),
            pl.BlockSpec((1, Tk, Cqp), lambda b, qi, ki: (b, ki, 0)),
            pl.BlockSpec((1, Tk, Cp), lambda b, qi, ki: (b, ki, 0)),
            pl.BlockSpec((1, Tk), lambda b, qi, ki: (0, ki)),
            pl.BlockSpec(memory_space=pltpu.MemorySpace.SMEM),
        ]
        out_spec = pl.BlockSpec((1, Tq, Cp), lambda b, qi, ki: (b, qi, 0))
        scratch = (pltpu.VMEM((Tq, 1), f32),      # running max
                   pltpu.VMEM((Tq, 1), f32),      # running denominator
                   pltpu.VMEM((Tq, Cp), f32))     # output accumulator
        dims = ("parallel", "parallel", "arbitrary")

    out_padded = pl.pallas_call(
        kernel,
        out_shape=jax.ShapeDtypeStruct((B, Np, Cp), f32),
        grid_spec=pltpu.PrefetchScalarGridSpec(
            num_scalar_prefetch=0,
            grid=grid,
            in_specs=in_specs,
            out_specs=out_spec,
            scratch_shapes=scratch,
        ),
        compiler_params=pltpu.CompilerParams(
            dimension_semantics=dims,
            vmem_limit_bytes=attn_vmem,
        ),
    )(xt, q_all, k_all, v_all, kbias, gamma_arr)

    out = out_padded[:, :N, :C]                               # drop token/channel padding
    return jnp.transpose(out, (0, 2, 1)).reshape(B, C, W, H)


# ---------------------------------------------------------------------------
# Pure-JAX reference (mirrors the PyTorch forward exactly, f32).
# ---------------------------------------------------------------------------
def self_attn_ref(x, wq, bq, wk, bk, wv, bv, gamma):
    B, C, W, H = x.shape
    N = W * H
    xf = x.reshape(B, C, N)
    q = jnp.einsum('oc,bcn->bon', wq, xf) + bq[None, :, None]   # (B, Cq, N)
    k = jnp.einsum('oc,bcn->bon', wk, xf) + bk[None, :, None]   # (B, Cq, N)
    v = jnp.einsum('oc,bcn->bon', wv, xf) + bv[None, :, None]   # (B, C,  N)
    energy = jnp.einsum('bci,bcj->bij', q, k)                   # (B, N, N)
    attn = jax.nn.softmax(energy, axis=-1)
    out = jnp.einsum('bcj,bij->bci', v, attn)                   # (B, C, N)
    return (gamma * out + xf).reshape(B, C, W, H)


def _make_inputs(key, B, C, W, H):
    Cq = C // 8
    ks = jax.random.split(key, 7)
    x = jax.random.normal(ks[0], (B, C, W, H), jnp.float32)
    wq = jax.random.normal(ks[1], (Cq, C), jnp.float32) * 0.1
    bq = jax.random.normal(ks[2], (Cq,), jnp.float32) * 0.1
    wk = jax.random.normal(ks[3], (Cq, C), jnp.float32) * 0.1
    bk = jax.random.normal(ks[4], (Cq,), jnp.float32) * 0.1
    wv = jax.random.normal(ks[5], (C, C), jnp.float32) * 0.1
    bv = jax.random.normal(ks[6], (C,), jnp.float32) * 0.1
    return x, wq, bq, wk, bk, wv, bv


if __name__ == "__main__":
    key = jax.random.PRNGKey(0)
    k1, k2, k3 = jax.random.split(key, 3)

    # gamma is initialized to 0 in the module; use a nonzero value so the attention
    # path is actually exercised / verified.
    gamma = jnp.float32(0.5)

    # Test 1: B=2, C=16, 8x8 (N=64) — single-kv whole-row-softmax path, no padding.
    x1, *p1 = _make_inputs(k1, 2, 16, 8, 8)
    out1 = jax.block_until_ready(self_attn_pallas(x1, *p1, gamma))
    ref1 = self_attn_ref(x1, *p1, gamma)
    assert out1.shape == x1.shape
    assert jnp.allclose(out1, ref1, atol=3e-2, rtol=3e-2), "mismatch vs reference (test 1)"

    # Test 2: B=1, C=16, 12x12 (N=144) — single-kv path with token padding and the
    # query-tile split (>=2 query tiles for the second TensorCore).
    x2, *p2 = _make_inputs(k2, 1, 16, 12, 12)
    out2 = jax.block_until_ready(self_attn_pallas(x2, *p2, gamma))
    ref2 = self_attn_ref(x2, *p2, gamma)
    assert out2.shape == x2.shape
    assert jnp.allclose(out2, ref2, atol=3e-2, rtol=3e-2), "mismatch vs reference (test 2)"

    # Test 3: B=1, C=16, 17x17 (N=289) — forced flash / online-softmax fallback path
    # (128-wide kv tiles, padded keys masked via the bias row, fully-padded last tile).
    x3, *p3 = _make_inputs(k3, 1, 16, 17, 17)
    out3 = jax.block_until_ready(self_attn_pallas(x3, *p3, gamma, max_kv_tokens=128))
    ref3 = self_attn_ref(x3, *p3, gamma)
    assert out3.shape == x3.shape
    assert jnp.allclose(out3, ref3, atol=3e-2, rtol=3e-2), "mismatch vs reference (test 3)"

    print("KERNEL_OK")
</pallas_src>

<mosaic_0001>
module attributes {stable_mosaic.version = 11 : i64} {
  func.func @_qkv_proj_kernel(%arg0: i32, %arg1: i32, %arg2: memref<1x64x128xf32, #tpu.memory_space<vmem>>, %arg3: memref<128x384xbf16, #tpu.memory_space<vmem>>, %arg4: memref<1x384xf32, #tpu.memory_space<vmem>>, %arg5: memref<1x64x128xbf16, #tpu.memory_space<vmem>>, %arg6: memref<1x64x128xbf16, #tpu.memory_space<vmem>>, %arg7: memref<1x64x128xbf16, #tpu.memory_space<vmem>>) attributes {dimension_semantics = [#tpu.dimension_semantics<parallel>, #tpu.dimension_semantics<parallel>], iteration_bounds = array<i64: 2, 1>, scalar_prefetch = 0 : i64, scratch_operands = 0 : i64, tpu.core_type = #tpu.core_type<tc>, window_params = [{transform_indices = @transform_0, window_bounds = array<i64: 1, 64, 128>}, {pipeline_mode = #tpu.pipeline_mode<synchronous>, transform_indices = @transform_1, window_bounds = array<i64: 128, 384>}, {pipeline_mode = #tpu.pipeline_mode<synchronous>, transform_indices = @transform_2, window_bounds = array<i64: 1, 384>}, {transform_indices = @transform_3, window_bounds = array<i64: 1, 64, 128>}, {transform_indices = @transform_4, window_bounds = array<i64: 1, 64, 128>}, {transform_indices = @transform_5, window_bounds = array<i64: 1, 64, 128>}]} {
    %c0 = arith.constant 0 : index
    %c0_0 = arith.constant 0 : index
    %c0_1 = arith.constant 0 : index
    %0 = vector.load %arg2[%c0, %c0_0, %c0_1] : memref<1x64x128xf32, #tpu.memory_space<vmem>>, vector<1x64x128xf32>
    %1 = vector.shape_cast %0 : vector<1x64x128xf32> to vector<64x128xf32>
    %2 = arith.truncf %1 : vector<64x128xf32> to vector<64x128xbf16>
    %c0_2 = arith.constant 0 : index
    %c0_3 = arith.constant 0 : index
    %3 = vector.load %arg3[%c0_2, %c0_3] : memref<128x384xbf16, #tpu.memory_space<vmem>>, vector<128x384xbf16>
    %cst = arith.constant dense<0.000000e+00> : vector<64x384xf32>
    %4 = tpu.matmul %2, %3, %cst {dimension_numbers = #tpu.dot_dimension_numbers<[1], [0], [0], [1], [0, 0, 1, 1], [], []>} : vector<64x128xbf16>, vector<128x384xbf16>, vector<64x384xf32> -> vector<64x384xf32>
    %c0_4 = arith.constant 0 : index
    %c0_5 = arith.constant 0 : index
    %5 = vector.load %arg4[%c0_4, %c0_5] : memref<1x384xf32, #tpu.memory_space<vmem>>, vector<1x384xf32>
    %6 = vector.broadcast %5 : vector<1x384xf32> to vector<64x384xf32>
    %7 = arith.addf %4, %6 : vector<64x384xf32>
    %8 = arith.truncf %7 : vector<64x384xf32> to vector<64x384xbf16>
    %9 = vector.extract_strided_slice %8 {offsets = [0, 0], sizes = [64, 128], strides = [1, 1]} : vector<64x384xbf16> to vector<64x128xbf16>
    %c0_6 = arith.constant 0 : index
    %c0_7 = arith.constant 0 : index
    %c0_8 = arith.constant 0 : index
    %10 = vector.load %arg5[%c0_6, %c0_7, %c0_8] : memref<1x64x128xbf16, #tpu.memory_space<vmem>>, vector<1x64x128xbf16>
    %11 = vector.shape_cast %10 : vector<1x64x128xbf16> to vector<64x128xbf16>
    %12 = vector.shape_cast %9 : vector<64x128xbf16> to vector<1x64x128xbf16>
    tpu.vector_store %arg5[%c0_6, %c0_7, %c0_8], %12 {strides = array<i32>} : memref<1x64x128xbf16, #tpu.memory_space<vmem>>, vector<1x64x128xbf16>,
    %13 = vector.extract_strided_slice %8 {offsets = [0, 128], sizes = [64, 128], strides = [1, 1]} : vector<64x384xbf16> to vector<64x128xbf16>
    %c0_9 = arith.constant 0 : index
    %c0_10 = arith.constant 0 : index
    %c0_11 = arith.constant 0 : index
    %14 = vector.load %arg6[%c0_9, %c0_10, %c0_11] : memref<1x64x128xbf16, #tpu.memory_space<vmem>>, vector<1x64x128xbf16>
    %15 = vector.shape_cast %14 : vector<1x64x128xbf16> to vector<64x128xbf16>
    %16 = vector.shape_cast %13 : vector<64x128xbf16> to vector<1x64x128xbf16>
    tpu.vector_store %arg6[%c0_9, %c0_10, %c0_11], %16 {strides = array<i32>} : memref<1x64x128xbf16, #tpu.memory_space<vmem>>, vector<1x64x128xbf16>,
    %17 = vector.extract_strided_slice %8 {offsets = [0, 256], sizes = [64, 128], strides = [1, 1]} : vector<64x384xbf16> to vector<64x128xbf16>
    %c0_12 = arith.constant 0 : index
    %c0_13 = arith.constant 0 : index
    %c0_14 = arith.constant 0 : index
    %18 = vector.load %arg7[%c0_12, %c0_13, %c0_14] : memref<1x64x128xbf16, #tpu.memory_space<vmem>>, vector<1x64x128xbf16>
    %19 = vector.shape_cast %18 : vector<1x64x128xbf16> to vector<64x128xbf16>
    %20 = vector.shape_cast %17 : vector<64x128xbf16> to vector<1x64x128xbf16>
    tpu.vector_store %arg7[%c0_12, %c0_13, %c0_14], %20 {strides = array<i32>} : memref<1x64x128xbf16, #tpu.memory_space<vmem>>, vector<1x64x128xbf16>,
    return
  }
  func.func @transform_0(%arg0: i32, %arg1: i32) -> (i32, i32, i32) {
    %c0_i32 = arith.constant 0 : i32
    %c0_i32_0 = arith.constant 0 : i32
    return %arg0, %arg1, %c0_i32 : i32, i32, i32
  }
  func.func @transform_1(%arg0: i32, %arg1: i32) -> (i32, i32) {
    %c0_i32 = arith.constant 0 : i32
    %c0_i32_0 = arith.constant 0 : i32
    %c0_i32_1 = arith.constant 0 : i32
    return %c0_i32, %c0_i32_0 : i32, i32
  }
  func.func @transform_2(%arg0: i32, %arg1: i32) -> (i32, i32) {
    %c0_i32 = arith.constant 0 : i32
    %c0_i32_0 = arith.constant 0 : i32
    %c0_i32_1 = arith.constant 0 : i32
    return %c0_i32, %c0_i32_0 : i32, i32
  }
  func.func @transform_3(%arg0: i32, %arg1: i32) -> (i32, i32, i32) {
    %c0_i32 = arith.constant 0 : i32
    %c0_i32_0 = arith.constant 0 : i32
    return %arg0, %arg1, %c0_i32 : i32, i32, i32
  }
  func.func @transform_4(%arg0: i32, %arg1: i32) -> (i32, i32, i32) {
    %c0_i32 = arith.constant 0 : i32
    %c0_i32_0 = arith.constant 0 : i32
    return %arg0, %arg1, %c0_i32 : i32, i32, i32
  }
  func.func @transform_5(%arg0: i32, %arg1: i32) -> (i32, i32, i32) {
    %c0_i32 = arith.constant 0 : i32
    %c0_i32_0 = arith.constant 0 : i32
    return %arg0, %arg1, %c0_i32 : i32, i32, i32
  }
}

</mosaic_0001>

<llo_original>
// kernel: tpu_custom_call.1
$region0: #{tpu_custom_call.1}
  #allocation0 [shape = 'u32[]', space=smem, size = 0x4, offset = 0x4, fixed_abs, tag = 'smem constant byte address 0x4 - core index']
  #allocation1 [shape = 'u32[72,128]{1,0:T(1,128)}', space=vmem, size = 0x9000, scoped, tag = 'internal scratch']
  %s0 = inlined_call_operand.hbm [shape: f32[2,64,128], index: 0, kind: input, shape index: {}]
  %s1 = inlined_call_operand.hbm [shape: bf16[128,384], index: 1, kind: input, shape index: {}]
  %s2 = inlined_call_operand.hbm [shape: f32[1,384], index: 2, kind: input, shape index: {}]
  %s3 = inlined_call_operand.hbm [shape: bf16[2,64,128], index: 3, kind: output, shape index: {0}]
  %s4 = inlined_call_operand.hbm [shape: bf16[2,64,128], index: 4, kind: output, shape index: {1}]
  %s5 = inlined_call_operand.hbm [shape: bf16[2,64,128], index: 5, kind: output, shape index: {2}]
  %6 = xla_tuple %s3, %s4, %s5
  %s7 = sld [smem:[#allocation0]]
  $region73: #{tpu_custom_call.1} parent=0
    _
  %s9 = ssub.s32 1, %s7
  %s10 = scalar_select 0, %s9, %s7
  $region1: #{tpu_custom_call.1} parent=0
    #allocation2 [shape = 'u8[65536]{0}', space=vmem, size = 0x10000, scoped, tag = 'input window, operand 0']
    #allocation3 [shape = 's32[2]{0}', space=sflag, size = 0x8, scoped, tag = 'scoped memory for tpu_custom_call.1']
    #allocation4 [shape = 's32[2]{0}', space=sflag, size = 0x8, scoped, tag = 'scoped memory for tpu_custom_call.1']
    #allocation5 [shape = 'u8[98304]{0}', space=vmem, size = 0x18000, scoped, tag = 'input window, operand 1, single buffered']
    #allocation6 [shape = 's32[1]{0}', space=sflag, size = 0x4, scoped, tag = 'scoped memory for tpu_custom_call.1']
    #allocation7 [shape = 'u8[1536]{0}', space=vmem, size = 0x800, scoped, tag = 'input window, operand 2, single buffered']
    #allocation8 [shape = 'u8[32768]{0}', space=vmem, size = 0x8000, scoped, tag = 'output window, operand 0']
    #allocation9 [shape = 'u8[32768]{0}', space=vmem, size = 0x8000, scoped, tag = 'output window, operand 1']
    #allocation10 [shape = 's32[2]{0}', space=sflag, size = 0x8, scoped, tag = 'scoped memory for tpu_custom_call.1']
    #allocation11 [shape = 'u8[32768]{0}', space=vmem, size = 0x8000, scoped, tag = 'output window, operand 2']
    %11 = vsyncpa [#allocation3], 0
    %s12 = scalar_lea.sflag [#allocation3], 1
    %13 = vsyncpa %s12, 0
    %14 = vsyncpa [#allocation6], 0
    %15 = vsyncpa [#allocation4], 0
    %s16 = scalar_lea.sflag [#allocation4], 1
    %17 = vsyncpa %s16, 0
    %18 = vsyncpa [#allocation10], 0
    %s19 = scalar_lea.sflag [#allocation10], 1
    %20 = vsyncpa %s19, 0
    loop: start=0, step=1, limit=4
    $region2: #{tpu_custom_call.1} parent=1 // loop_pre_header
      _
    $region3: #{tpu_custom_call.1} parent=1 // loop_header
      %s22 = sphi 0, %s26
      %p23 = scmp.ge.s32.totalorder %s22, 4
      %s29 = sphi 0, %s41
      %s30 = sphi 0, %s37
      %s31 = sphi 0, %s29
      %s32 = sphi 0, %s30
      %s33 = sphi 0, %s31
      %s34 = sphi 0, %s32
      %s46 = sphi 0, %s48
      %s49 = sphi 0, %s46
      %s50 = sphi 0, %s49
      %s66 = sphi 0, %s50
      %s70 = sphi 0, %s70
      %s72 = sphi 0, %s70
      %s73 = sphi 0, %s72
      %s87 = sphi 0, %s73
      %s91 = sphi 0, %s91
      %s93 = sphi 0, %s91
      %s94 = sphi 0, %s93
      %s108 = sphi 0, %s94
      %s116 = sphi 0, %s118
      %s119 = sphi 0, %s116
      %s120 = sphi 0, %s119
      %s136 = sphi 0, %s120
      %s144 = sphi 0, %s146
      %s147 = sphi 0, %s144
      %s148 = sphi 0, %s147
      %s164 = sphi 0, %s148
      %s172 = sphi 0, %s174
      %s175 = sphi 0, %s172
      %s176 = sphi 0, %s175
      %s192 = sphi 0, %s176
    $region4: #{tpu_custom_call.1} parent=1 // loop_header_branch
      %25 = sbr.rel (%p23) target = $region8
    $region5: #{tpu_custom_call.1} parent=1 // loop_body
      %s27 = ssub.s32 %s22, 1
      %s28 = ssub.s32 %s22, 2
      %s35 = sadd.s32 1, %s30
      %p36 = scmp.ge.s32.totalorder %s35, 1
      %s37 = scalar_select %p36, 0, %s35
      %s38 = sadd.s32 1, %s29
      %s39 = scalar_select %p36, %s38, %s29
      %p40 = scmp.ge.s32.totalorder %s39, 2
      %s41 = scalar_select %p40, 0, %s39
      %s42 = ssub.s32 %s29, %s41
      %s43 = ssub.s32 %s30, %s37
      %s44 = sor.u32 %s42, %s43
      %p45 = scmp.eq.s32.totalorder %s44, 0
      %s47 = sadd.s32 %s46, 1
      %s48 = scalar_select %p45, %s46, %s47
      %p51 = pneg %p45
      %p52 = scmp.eq.s32.totalorder %s22, 1
      %p53 = por %p51, %p52
      %p54 = scmp.ne.s32.totalorder %s46, %s49
      %p55 = scmp.eq.s32.totalorder %s22, 0
      %p56 = por %p54, %p55
      %p57 = scmp.ne.s32.totalorder %s46, %s49
      %p58 = scmp.eq.s32.totalorder %s27, 1
      %p59 = por %p57, %p58
      %p60 = scmp.ne.s32.totalorder %s49, %s50
      %p61 = scmp.eq.s32.totalorder %s27, 0
      %p62 = por %p60, %p61
      %p63 = scmp.ne.s32.totalorder %s49, %s50
      %p64 = scmp.eq.s32.totalorder %s28, 1
      %p65 = por %p63, %p64
      %p67 = scmp.ne.s32.totalorder %s50, %s66
      %p68 = scmp.eq.s32.totalorder %s28, 0
      %p69 = por %p67, %p68
      %s71 = sadd.s32 %s70, 1
      %p74 = scmp.eq.s32.totalorder %s22, 1
      %p75 = scmp.ne.s32.totalorder %s70, %s72
      %p76 = scmp.eq.s32.totalorder %s22, 0
      %p77 = por %p75, %p76
      %p78 = scmp.ne.s32.totalorder %s70, %s72
      %p79 = scmp.eq.s32.totalorder %s27, 1
      %p80 = por %p78, %p79
      %p81 = scmp.ne.s32.totalorder %s72, %s73
      %p82 = scmp.eq.s32.totalorder %s27, 0
      %p83 = por %p81, %p82
      %p84 = scmp.ne.s32.totalorder %s72, %s73
      %p85 = scmp.eq.s32.totalorder %s28, 1
      %p86 = por %p84, %p85
      %p88 = scmp.ne.s32.totalorder %s73, %s87
      %p89 = scmp.eq.s32.totalorder %s28, 0
      %p90 = por %p88, %p89
      %s92 = sadd.s32 %s91, 1
      %p95 = scmp.eq.s32.totalorder %s22, 1
      %p96 = scmp.ne.s32.totalorder %s91, %s93
      %p97 = scmp.eq.s32.totalorder %s22, 0
      %p98 = por %p96, %p97
      %p99 = scmp.ne.s32.totalorder %s91, %s93
      %p100 = scmp.eq.s32.totalorder %s27, 1
      %p101 = por %p99, %p100
      %p102 = scmp.ne.s32.totalorder %s93, %s94
      %p103 = scmp.eq.s32.totalorder %s27, 0
      %p104 = por %p102, %p103
      %p105 = scmp.ne.s32.totalorder %s93, %s94
      %p106 = scmp.eq.s32.totalorder %s28, 1
      %p107 = por %p105, %p106
      %p109 = scmp.ne.s32.totalorder %s94, %s108
      %p110 = scmp.eq.s32.totalorder %s28, 0
      %p111 = por %p109, %p110
      %s112 = ssub.s32 %s29, %s41
      %s113 = ssub.s32 %s30, %s37
      %s114 = sor.u32 %s112, %s113
      %p115 = scmp.eq.s32.totalorder %s114, 0
      %s117 = sadd.s32 %s116, 1
      %s118 = scalar_select %p115, %s116, %s117
      %p121 = pneg %p115
      %p122 = scmp.eq.s32.totalorder %s22, 1
      %p123 = por %p121, %p122
      %p124 = scmp.ne.s32.totalorder %s116, %s119
      %p125 = scmp.eq.s32.totalorder %s22, 0
      %p126 = por %p124, %p125
      %p127 = scmp.ne.s32.totalorder %s116, %s119
      %p128 = scmp.eq.s32.totalorder %s27, 1
      %p129 = por %p127, %p128
      %p130 = scmp.ne.s32.totalorder %s119, %s120
      %p131 = scmp.eq.s32.totalorder %s27, 0
      %p132 = por %p130, %p131
      %p133 = scmp.ne.s32.totalorder %s119, %s120
      %p134 = scmp.eq.s32.totalorder %s28, 1
      %p135 = por %p133, %p134
      %p137 = scmp.ne.s32.totalorder %s120, %s136
      %p138 = scmp.eq.s32.totalorder %s28, 0
      %p139 = por %p137, %p138
      %s140 = ssub.s32 %s29, %s41
      %s141 = ssub.s32 %s30, %s37
      %s142 = sor.u32 %s140, %s141
      %p143 = scmp.eq.s32.totalorder %s142, 0
      %s145 = sadd.s32 %s144, 1
      %s146 = scalar_select %p143, %s144, %s145
      %p149 = pneg %p143
      %p150 = scmp.eq.s32.totalorder %s22, 1
      %p151 = por %p149, %p150
      %p152 = scmp.ne.s32.totalorder %s144, %s147
      %p153 = scmp.eq.s32.totalorder %s22, 0
      %p154 = por %p152, %p153
      %p155 = scmp.ne.s32.totalorder %s144, %s147
      %p156 = scmp.eq.s32.totalorder %s27, 1
      %p157 = por %p155, %p156
      %p158 = scmp.ne.s32.totalorder %s147, %s148
      %p159 = scmp.eq.s32.totalorder %s27, 0
      %p160 = por %p158, %p159
      %p161 = scmp.ne.s32.totalorder %s147, %s148
      %p162 = scmp.eq.s32.totalorder %s28, 1
      %p163 = por %p161, %p162
      %p165 = scmp.ne.s32.totalorder %s148, %s164
      %p166 = scmp.eq.s32.totalorder %s28, 0
      %p167 = por %p165, %p166
      %s168 = ssub.s32 %s29, %s41
      %s169 = ssub.s32 %s30, %s37
      %s170 = sor.u32 %s168, %s169
      %p171 = scmp.eq.s32.totalorder %s170, 0
      %s173 = sadd.s32 %s172, 1
      %s174 = scalar_select %p171, %s172, %s173
      %p177 = pneg %p171
      %p178 = scmp.eq.s32.totalorder %s22, 1
      %p179 = por %p177, %p178
      %p180 = scmp.ne.s32.totalorder %s172, %s175
      %p181 = scmp.eq.s32.totalorder %s22, 0
      %p182 = por %p180, %p181
      %p183 = scmp.ne.s32.totalorder %s172, %s175
      %p184 = scmp.eq.s32.totalorder %s27, 1
      %p185 = por %p183, %p184
      %p186 = scmp.ne.s32.totalorder %s175, %s176
      %p187 = scmp.eq.s32.totalorder %s27, 0
      %p188 = por %p186, %p187
      %p189 = scmp.ne.s32.totalorder %s175, %s176
      %p190 = scmp.eq.s32.totalorder %s28, 1
      %p191 = por %p189, %p190
      %p193 = scmp.ne.s32.totalorder %s176, %s192
      %p194 = scmp.eq.s32.totalorder %s28, 0
      %p195 = por %p193, %p194
      %p196 = scmp.le.s32.totalorder 1, %s22
      %p197 = scmp.lt.s32.totalorder %s22, 3
      %p198 = pnand %p196, %p197
      %p199 = pneg %p198
      // Predicated region
      $region9: #{tpu_custom_call.1} parent=5 // pred_check
        _
      $region10: #{tpu_custom_call.1} parent=5 // pred_check_branch
        %201 = sbr.rel (%p198) target = $region12
      $region11: #{tpu_custom_call.1} parent=5 // pred_region
        %s202 = ssub.s32 %s22, 1
        // Predicated region
        $region13: #{tpu_custom_call.1} parent=11 // pred_check
          %p203 = pneg %p83
        $region14: #{tpu_custom_call.1} parent=11 // pred_check_branch
          %205 = sbr.rel (%p203) target = $region16
        $region15: #{tpu_custom_call.1} parent=11 // pred_region
          %207 = vsyncadd [#allocation6], 0
          %s208 = sshll.u32 %s1, 4
          %s209 = int_to_ptr.hbm [resolvable:$true] %s208
          %s210 = sshll.u32 [#allocation5], 4
          %s211 = int_to_ptr.vmem [resolvable:$true] %s210
          %216 = dma.hbm_to_vmem [thread:$0]  %s209, 3072, %s211, [#allocation6], 192, 192, 12
        $region16: #{tpu_custom_call.1} parent=11 // pred_fallthru
          _
        // Predicated region
        $region17: #{tpu_custom_call.1} parent=11 // pred_check
          %p217 = pneg %p104
        $region18: #{tpu_custom_call.1} parent=11 // pred_check_branch
          %219 = sbr.rel (%p217) target = $region20
        $region19: #{tpu_custom_call.1} parent=11 // pred_region
          %221 = vsyncadd [#allocation6], 0
          %s223 = sshll.u32 %s2, 4
          %s224 = int_to_ptr.hbm [resolvable:$true] %s223
          %s225 = sshll.u32 [#allocation7], 4
          %s226 = int_to_ptr.vmem [resolvable:$true] %s225
          %228 = dma.hbm_to_vmem [thread:$0]  %s224, 48, %s226, [#allocation6]
        $region20: #{tpu_custom_call.1} parent=11 // pred_fallthru
          _
      $region12: #{tpu_custom_call.1} parent=5 // pred_fallthru
        _
      %p229 = scmp.lt.s32.totalorder %s22, 2
      // Predicated region
      $region21: #{tpu_custom_call.1} parent=5 // pred_check
        %p230 = pneg %p229
      $region22: #{tpu_custom_call.1} parent=5 // pred_check_branch
        %232 = sbr.rel (%p230) target = $region24
      $region23: #{tpu_custom_call.1} parent=5 // pred_region
        // Predicated region
        $region25: #{tpu_custom_call.1} parent=23 // pred_check
          %p233 = pneg %p56
        $region26: #{tpu_custom_call.1} parent=23 // pred_check_branch
          %235 = sbr.rel (%p233) target = $region28
        $region27: #{tpu_custom_call.1} parent=23 // pred_region
          %s236 = sand.u32 %s46, 1
          %s237 = scalar_lea.sflag [#allocation3], %s236
          %s238 = sand.u32 %s46, 1
          %s239 = smul.addr %s238, 64
          %s240 = scalar_lea.vmem [#allocation2], %s239
          %s241 = smul.u32 8, %s30
          %243 = vsyncadd %s237, 0
          %s244 = smul.addr %s29, 8
          %s245 = sadd.s32 %s241, %s244
          %s246 = smul.addr %s245, 8
          %s247 = scalar_lea.hbm %s0, %s246
          %s248 = sshll.u32 %s247, 4
          %s249 = int_to_ptr.hbm [resolvable:$true] %s248
          %s250 = sshll.u32 %s240, 4
          %s251 = int_to_ptr.vmem [resolvable:$true] %s250
          %256 = dma.hbm_to_vmem [thread:$0]  %s249, 1024, %s251, %s237, 128, 128, 8
        $region28: #{tpu_custom_call.1} parent=23 // pred_fallthru
          _
      $region24: #{tpu_custom_call.1} parent=5 // pred_fallthru
        _
      %p257 = scmp.le.s32.totalorder 1, %s22
      %p258 = scmp.lt.s32.totalorder %s22, 3
      %p259 = pnand %p257, %p258
      %p260 = pneg %p259
      // Predicated region
      $region29: #{tpu_custom_call.1} parent=5 // pred_check
        _
      $region30: #{tpu_custom_call.1} parent=5 // pred_check_branch
        %262 = sbr.rel (%p259) target = $region32
      $region31: #{tpu_custom_call.1} parent=5 // pred_region
        %s263 = ssub.s32 %s22, 1
        %s264 = sand.u32 %s49, 1
        %s265 = scalar_lea.sflag [#allocation3], %s264
        %s266 = sand.u32 %s49, 1
        %s267 = smul.addr %s266, 64
        %s268 = scalar_lea.vmem [#allocation2], %s267
        // Predicated region
        $region33: #{tpu_custom_call.1} parent=31 // pred_check
          %p269 = pneg %p62
        $region34: #{tpu_custom_call.1} parent=31 // pred_check_branch
          %271 = sbr.rel (%p269) target = $region36
        $region35: #{tpu_custom_call.1} parent=31 // pred_region
          %273 = dma.done %s265, 1024
        $region36: #{tpu_custom_call.1} parent=31 // pred_fallthru
          _
        // Predicated region
        $region37: #{tpu_custom_call.1} parent=31 // pred_check
          %p274 = pneg %p83
        $region38: #{tpu_custom_call.1} parent=31 // pred_check_branch
          %276 = sbr.rel (%p274) target = $region40
        $region39: #{tpu_custom_call.1} parent=31 // pred_region
          %278 = dma.done [#allocation6], 3072
        $region40: #{tpu_custom_call.1} parent=31 // pred_fallthru
          _
        // Predicated region
        $region41: #{tpu_custom_call.1} parent=31 // pred_check
          %p279 = pneg %p104
        $region42: #{tpu_custom_call.1} parent=31 // pred_check_branch
          %281 = sbr.rel (%p279) target = $region44
        $region43: #{tpu_custom_call.1} parent=31 // pred_region
          %283 = dma.done [#allocation6], 48
        $region44: #{tpu_custom_call.1} parent=31 // pred_fallthru
          _
        %s284 = sand.u32 %s49, 1
        %s285 = scalar_lea.sflag [#allocation3], %s284
        %s286 = sand.u32 %s49, 1
        %s287 = smul.addr %s286, 64
        %s288 = scalar_lea.vmem [#allocation2], %s287
        %p289 = pneg %p62
        %p290 = pneg %p59
        %p291 = pneg %p83
        %p292 = pneg %p80
        %p293 = pneg %p104
        %p294 = pneg %p101
        %p295 = pneg %p132
        %p296 = pneg %p129
        %s297 = sand.u32 %s119, 1
        %s298 = scalar_lea.sflag [#allocation4], %s297
        %s299 = sand.u32 %s119, 1
        %s300 = smul.addr %s299, 32
        %s301 = scalar_lea.vmem [#allocation8], %s300
        %p302 = pneg %p160
        %p303 = pneg %p157
        %s304 = sand.u32 %s27, 1
        %s305 = scalar_lea.sflag [#allocation10], %s304
        %s306 = sand.u32 %s147, 1
        %s307 = smul.addr %s306, 32
        %s308 = scalar_lea.vmem [#allocation9], %s307
        %p309 = pneg %p188
        %p310 = pneg %p185
        %s311 = sand.u32 %s27, 1
        %s312 = scalar_lea.sflag [#allocation10], %s311
        %s313 = sand.u32 %s175, 1
        %s314 = smul.addr %s313, 32
        %s315 = scalar_lea.vmem [#allocation11], %s314
        %s316 = smul.u32 8, %s32
        %s317 = smul.u32 8, %s32
        %s318 = smul.u32 8, %s32
        %s319 = smul.u32 8, %s32
        %v320 = vld [vmem:[%s268] sm:$0xff]
        %v321 = vld [vmem:[%s268 + $0x8] sm:$0xff]
        %v322 = vld [vmem:[%s268 + $0x10] sm:$0xff]
        %v323 = vld [vmem:[%s268 + $0x18] sm:$0xff]
        %v324 = vld [vmem:[%s268 + $0x20] sm:$0xff]
        %v325 = vld [vmem:[%s268 + $0x28] sm:$0xff]
        %v326 = vld [vmem:[%s268 + $0x30] sm:$0xff]
        %v327 = vld [vmem:[%s268 + $0x38] sm:$0xff]
        %v328 = vpack.c.bf16 %v321, %v320
        %v329 = vpack.c.bf16 %v323, %v322
        %v330 = vpack.c.bf16 %v325, %v324
        %v331 = vpack.c.bf16 %v327, %v326
        %v332 = vld [vmem:[#allocation5] sm:$0xff]
        %v333 = vld [vmem:[#allocation5 + $0x8] sm:$0xf]
        %v334 = vld [vmem:[#allocation5 + $0xc] sm:$0xff]
        %v335 = vld [vmem:[#allocation5 + $0x14] sm:$0xf]
        %v336 = vld [vmem:[#allocation5 + $0x18] sm:$0xff]
        %v337 = vld [vmem:[#allocation5 + $0x20] sm:$0xf]
        %v338 = vld [vmem:[#allocation5 + $0x24] sm:$0xff]
        %v339 = vld [vmem:[#allocation5 + $0x2c] sm:$0xf]
        %v340 = vld [vmem:[#allocation5 + $0x30] sm:$0xff]
        %v341 = vld [vmem:[#allocation5 + $0x38] sm:$0xf]
        %v342 = vld [vmem:[#allocation5 + $0x3c] sm:$0xff]
        %v343 = vld [vmem:[#allocation5 + $0x44] sm:$0xf]
        %v344 = vld [vmem:[#allocation5 + $0x48] sm:$0xff]
        %v345 = vld [vmem:[#allocation5 + $0x50] sm:$0xf]
        %v346 = vld [vmem:[#allocation5 + $0x54] sm:$0xff]
        %v347 = vld [vmem:[#allocation5 + $0x5c] sm:$0xf]
        %v348 = vld [vmem:[#allocation5 + $0x60] sm:$0xff]
        %v349 = vld [vmem:[#allocation5 + $0x68] sm:$0xf]
        %v350 = vld [vmem:[#allocation5 + $0x6c] sm:$0xff]
        %v351 = vld [vmem:[#allocation5 + $0x74] sm:$0xf]
        %v352 = vld [vmem:[#allocation5 + $0x78] sm:$0xff]
        %v353 = vld [vmem:[#allocation5 + $0x80] sm:$0xf]
        %v354 = vld [vmem:[#allocation5 + $0x84] sm:$0xff]
        %v355 = vld [vmem:[#allocation5 + $0x8c] sm:$0xf]
        %v356 = vld [vmem:[#allocation5 + $0x90] sm:$0xff]
        %v357 = vld [vmem:[#allocation5 + $0x98] sm:$0xf]
        %v358 = vld [vmem:[#allocation5 + $0x9c] sm:$0xff]
        %v359 = vld [vmem:[#allocation5 + $0xa4] sm:$0xf]
        %v360 = vld [vmem:[#allocation5 + $0xa8] sm:$0xff]
        %v361 = vld [vmem:[#allocation5 + $0xb0] sm:$0xf]
        %v362 = vld [vmem:[#allocation5 + $0xb4] sm:$0xff]
        %v363 = vld [vmem:[#allocation5 + $0xbc] sm:$0xf]
        %v364 = vld [vmem:[#allocation7] sm:$0x7]
        %v366 = vperm.slane %v364, 0
        %v367 = vperm.slane %v364, 1
        %v368 = vperm.slane %v364, 2
        %v404 = vunpack.c.l.b16 %v332
        %v405 = vunpack.c.h.b16 %v332
        %v406 = vunpack.c.l.b16 %v333
        %v407 = vunpack.c.l.b16 %v334
        %v408 = vunpack.c.h.b16 %v334
        %v409 = vunpack.c.l.b16 %v335
        %v410 = vunpack.c.l.b16 %v336
        %v411 = vunpack.c.h.b16 %v336
        %v412 = vunpack.c.l.b16 %v337
        %v413 = vunpack.c.l.b16 %v338
        %v414 = vunpack.c.h.b16 %v338
        %v415 = vunpack.c.l.b16 %v339
        %v416 = vunpack.c.l.b16 %v340
        %v417 = vunpack.c.h.b16 %v340
        %v418 = vunpack.c.l.b16 %v341
        %v419 = vunpack.c.l.b16 %v342
        %v420 = vunpack.c.h.b16 %v342
        %v421 = vunpack.c.l.b16 %v343
        %v422 = vunpack.c.l.b16 %v344
        %v423 = vunpack.c.h.b16 %v344
        %v424 = vunpack.c.l.b16 %v345
        %v425 = vunpack.c.l.b16 %v346
        %v426 = vunpack.c.h.b16 %v346
        %v427 = vunpack.c.l.b16 %v347
        %v428 = vunpack.c.l.b16 %v348
        %v429 = vunpack.c.h.b16 %v348
        %v430 = vunpack.c.l.b16 %v349
        %v431 = vunpack.c.l.b16 %v350
        %v432 = vunpack.c.h.b16 %v350
        %v433 = vunpack.c.l.b16 %v351
        %v434 = vunpack.c.l.b16 %v352
        %v435 = vunpack.c.h.b16 %v352
        %v436 = vunpack.c.l.b16 %v353
        %v437 = vunpack.c.l.b16 %v354
        %v438 = vunpack.c.h.b16 %v354
        %v439 = vunpack.c.l.b16 %v355
        %v440 = vunpack.c.l.b16 %v356
        %v441 = vunpack.c.h.b16 %v356
        %v442 = vunpack.c.l.b16 %v357
        %v443 = vunpack.c.l.b16 %v358
        %v444 = vunpack.c.h.b16 %v358
        %v445 = vunpack.c.l.b16 %v359
        %v446 = vunpack.c.l.b16 %v360
        %v447 = vunpack.c.h.b16 %v360
        %v448 = vunpack.c.l.b16 %v361
        %v449 = vunpack.c.l.b16 %v362
        %v450 = vunpack.c.h.b16 %v362
        %v451 = vunpack.c.l.b16 %v363
        %v452 = vpack.c.b16 %v407, %v404
        %v453 = vpack.c.b16 %v408, %v405
        %v454 = vpack.c.b16 %v409, %v406
        %v455 = vpack.c.b16 %v413, %v410
        %v456 = vpack.c.b16 %v414, %v411
        %v457 = vpack.c.b16 %v415, %v412
        %v458 = vpack.c.b16 %v419, %v416
        %v459 = vpack.c.b16 %v420, %v417
        %v460 = vpack.c.b16 %v421, %v418
        %v461 = vpack.c.b16 %v425, %v422
        %v462 = vpack.c.b16 %v426, %v423
        %v463 = vpack.c.b16 %v427, %v424
        %v464 = vpack.c.b16 %v431, %v428
        %v465 = vpack.c.b16 %v432, %v429
        %v466 = vpack.c.b16 %v433, %v430
        %v467 = vpack.c.b16 %v437, %v434
        %v468 = vpack.c.b16 %v438, %v435
        %v469 = vpack.c.b16 %v439, %v436
        %v470 = vpack.c.b16 %v443, %v440
        %v471 = vpack.c.b16 %v444, %v441
        %v472 = vpack.c.b16 %v445, %v442
        %v473 = vpack.c.b16 %v449, %v446
        %v474 = vpack.c.b16 %v450, %v447
        %v475 = vpack.c.b16 %v451, %v448
        %500 = vmatpush.bf16.msra.mxu0 %v473
        %501 = vmatpush.bf16.msra.mxu0 %v470
        %502 = vmatpush.bf16.msra.mxu0 %v467
        %503 = vmatpush.bf16.msra.mxu0 %v464
        %504 = vmatpush.bf16.msra.mxu0 %v461
        %505 = vmatpush.bf16.msra.mxu0 %v458
        %506 = vmatpush.bf16.msra.mxu0 %v455
        %507 = vmatpush.bf16.msra.mxu0 %v452
        %508 = vmatmul.bf16.gmra.mxu0 %v328
        %v509 = vpop.f32.mrf.mxu0
        %v510 = vadd.f32 %v366, %v509
        %v511 = vpop.f32.mrf.mxu0
        %v512 = vadd.f32 %v366, %v511
        %513 = vmatmul.bf16.gmra.mxu0 %v329
        %v514 = vpop.f32.mrf.mxu0
        %v515 = vadd.f32 %v366, %v514
        %v516 = vpop.f32.mrf.mxu0
        %v517 = vadd.f32 %v366, %v516
        %518 = vmatmul.bf16.gmra.mxu0 %v330
        %v519 = vpop.f32.mrf.mxu0
        %v520 = vadd.f32 %v366, %v519
        %v521 = vpop.f32.mrf.mxu0
        %v522 = vadd.f32 %v366, %v521
        %523 = vmatmul.bf16.gmra.mxu0 %v331
        %v524 = vpop.f32.mrf.mxu0
        %v525 = vadd.f32 %v366, %v524
        %v526 = vpop.f32.mrf.mxu0
        %v527 = vadd.f32 %v366, %v526
        %528 = vdwg.mxu0
        %529 = vmatpush.bf16.msra.mxu0 %v474
        %530 = vmatpush.bf16.msra.mxu0 %v471
        %531 = vmatpush.bf16.msra.mxu0 %v468
        %532 = vmatpush.bf16.msra.mxu0 %v465
        %533 = vmatpush.bf16.msra.mxu0 %v462
        %534 = vmatpush.bf16.msra.mxu0 %v459
        %535 = vmatpush.bf16.msra.mxu0 %v456
        %536 = vmatpush.bf16.msra.mxu0 %v453
        %537 = vmatmul.bf16.gmra.mxu0 %v328
        %v538 = vpop.f32.mrf.mxu0
        %v539 = vadd.f32 %v367, %v538
        %v540 = vpop.f32.mrf.mxu0
        %v541 = vadd.f32 %v367, %v540
        %542 = vmatmul.bf16.gmra.mxu0 %v329
        %v543 = vpop.f32.mrf.mxu0
        %v544 = vadd.f32 %v367, %v543
        %v545 = vpop.f32.mrf.mxu0
        %v546 = vadd.f32 %v367, %v545
        %547 = vmatmul.bf16.gmra.mxu0 %v330
        %v548 = vpop.f32.mrf.mxu0
        %v549 = vadd.f32 %v367, %v548
        %v550 = vpop.f32.mrf.mxu0
        %v551 = vadd.f32 %v367, %v550
        %552 = vmatmul.bf16.gmra.mxu0 %v331
        %v553 = vpop.f32.mrf.mxu0
        %v554 = vadd.f32 %v367, %v553
        %v555 = vpop.f32.mrf.mxu0
        %v556 = vadd.f32 %v367, %v555
        %557 = vdwg.mxu0
        %558 = vmatpush.bf16.msra.mxu0 %v475
        %559 = vmatpush.bf16.msra.mxu0 %v472
        %560 = vmatpush.bf16.msra.mxu0 %v469
        %561 = vmatpush.bf16.msra.mxu0 %v466
        %562 = vmatpush.bf16.msra.mxu0 %v463
        %563 = vmatpush.bf16.msra.mxu0 %v460
        %564 = vmatpush.bf16.msra.mxu0 %v457
        %565 = vmatpush.bf16.msra.mxu0 %v454
        %566 = vmatmul.bf16.gmra.mxu0 %v328
        %v567 = vpop.f32.mrf.mxu0
        %v568 = vadd.f32 %v368, %v567
        %v569 = vpop.f32.mrf.mxu0
        %v570 = vadd.f32 %v368, %v569
        %571 = vmatmul.bf16.gmra.mxu0 %v329
        %v572 = vpop.f32.mrf.mxu0
        %v573 = vadd.f32 %v368, %v572
        %v574 = vpop.f32.mrf.mxu0
        %v575 = vadd.f32 %v368, %v574
        %576 = vmatmul.bf16.gmra.mxu0 %v330
        %v577 = vpop.f32.mrf.mxu0
        %v578 = vadd.f32 %v368, %v577
        %v579 = vpop.f32.mrf.mxu0
        %v580 = vadd.f32 %v368, %v579
        %581 = vmatmul.bf16.gmra.mxu0 %v331
        %v582 = vpop.f32.mrf.mxu0
        %v583 = vadd.f32 %v368, %v582
        %v584 = vpop.f32.mrf.mxu0
        %v585 = vadd.f32 %v368, %v584
        %586 = vdwg.mxu0
        %v587 = vpack.c.bf16 %v539, %v510
        %v588 = vpack.c.bf16 %v568, %v568
        %v589 = vpack.c.bf16 %v541, %v512
        %v590 = vpack.c.bf16 %v570, %v570
        %v591 = vpack.c.bf16 %v544, %v515
        %v592 = vpack.c.bf16 %v573, %v573
        %v593 = vpack.c.bf16 %v546, %v517
        %v594 = vpack.c.bf16 %v575, %v575
        %v595 = vpack.c.bf16 %v549, %v520
        %v596 = vpack.c.bf16 %v578, %v578
        %v597 = vpack.c.bf16 %v551, %v522
        %v598 = vpack.c.bf16 %v580, %v580
        %v599 = vpack.c.bf16 %v554, %v525
        %v600 = vpack.c.bf16 %v583, %v583
        %v601 = vpack.c.bf16 %v556, %v527
        %v602 = vpack.c.bf16 %v585, %v585
        %603 = vst [vmem:[%s301] sm:$0xf] %v587
        %604 = vst [vmem:[%s301 + $0x4] sm:$0xf] %v589
        %605 = vst [vmem:[%s301 + $0x8] sm:$0xf] %v591
        %606 = vst [vmem:[%s301 + $0xc] sm:$0xf] %v593
        %607 = vst [vmem:[%s301 + $0x10] sm:$0xf] %v595
        %608 = vst [vmem:[%s301 + $0x14] sm:$0xf] %v597
        %609 = vst [vmem:[%s301 + $0x18] sm:$0xf] %v599
        %610 = vst [vmem:[%s301 + $0x1c] sm:$0xf] %v601
        %v619 = vrot.slane %v587, 4
        %v620 = vrot.slane %v589, 4
        %v621 = vrot.slane %v591, 4
        %v622 = vrot.slane %v593, 4
        %v623 = vrot.slane %v595, 4
        %v624 = vrot.slane %v597, 4
        %v625 = vrot.slane %v599, 4
        %v626 = vrot.slane %v601, 4
        %635 = vst [vmem:[%s308] sm:$0xf] %v619
        %636 = vst [vmem:[%s308 + $0x4] sm:$0xf] %v620
        %637 = vst [vmem:[%s308 + $0x8] sm:$0xf] %v621
        %638 = vst [vmem:[%s308 + $0xc] sm:$0xf] %v622
        %639 = vst [vmem:[%s308 + $0x10] sm:$0xf] %v623
        %640 = vst [vmem:[%s308 + $0x14] sm:$0xf] %v624
        %641 = vst [vmem:[%s308 + $0x18] sm:$0xf] %v625
        %642 = vst [vmem:[%s308 + $0x1c] sm:$0xf] %v626
        %643 = vst [vmem:[%s315] sm:$0xf] %v588
        %644 = vst [vmem:[%s315 + $0x4] sm:$0xf] %v590
        %645 = vst [vmem:[%s315 + $0x8] sm:$0xf] %v592
        %646 = vst [vmem:[%s315 + $0xc] sm:$0xf] %v594
        %647 = vst [vmem:[%s315 + $0x10] sm:$0xf] %v596
        %648 = vst [vmem:[%s315 + $0x14] sm:$0xf] %v598
        %649 = vst [vmem:[%s315 + $0x18] sm:$0xf] %v600
        %650 = vst [vmem:[%s315 + $0x1c] sm:$0xf] %v602
        %s651 = sand.u32 %s119, 1
        %s652 = scalar_lea.sflag [#allocation4], %s651
        %s653 = sand.u32 %s119, 1
        %s654 = smul.addr %s653, 32
        %s655 = scalar_lea.vmem [#allocation8], %s654
        %s656 = sand.u32 %s27, 1
        %s657 = scalar_lea.sflag [#allocation10], %s656
        %s658 = sand.u32 %s147, 1
        %s659 = smul.addr %s658, 32
        %s660 = scalar_lea.vmem [#allocation9], %s659
        %s661 = sand.u32 %s27, 1
        %s662 = scalar_lea.sflag [#allocation10], %s661
        %s663 = sand.u32 %s175, 1
        %s664 = smul.addr %s663, 32
        %s665 = scalar_lea.vmem [#allocation11], %s664
        // Predicated region
        $region45: #{tpu_custom_call.1} parent=31 // pred_check
          %p666 = pneg %p129
        $region46: #{tpu_custom_call.1} parent=31 // pred_check_branch
          %668 = sbr.rel (%p666) target = $region48
        $region47: #{tpu_custom_call.1} parent=31 // pred_region
          %s669 = smul.u32 8, %s32
          %671 = vsyncadd %s652, 0
          %s672 = smul.addr %s31, 8
          %s673 = sadd.s32 %s669, %s672
          %s674 = smul.addr %s673, 4
          %s675 = scalar_lea.hbm %s3, %s674
          %s676 = sshll.u32 %s655, 4
          %s677 = int_to_ptr.vmem [resolvable:$true] %s676
          %s678 = sshll.u32 %s675, 4
          %s679 = int_to_ptr.hbm [resolvable:$true] %s678
          %684 = dma.vmem_to_hbm [thread:$0]  %s677, 512, %s679, %s652, 64, 64, 4
        $region48: #{tpu_custom_call.1} parent=31 // pred_fallthru
          _
        // Predicated region
        $region49: #{tpu_custom_call.1} parent=31 // pred_check
          %p685 = pneg %p157
        $region50: #{tpu_custom_call.1} parent=31 // pred_check_branch
          %687 = sbr.rel (%p685) target = $region52
        $region51: #{tpu_custom_call.1} parent=31 // pred_region
          %s688 = smul.u32 8, %s32
          %690 = vsyncadd %s657, 0
          %s691 = smul.addr %s31, 8
          %s692 = sadd.s32 %s688, %s691
          %s693 = smul.addr %s692, 4
          %s694 = scalar_lea.hbm %s4, %s693
          %s695 = sshll.u32 %s660, 4
          %s696 = int_to_ptr.vmem [resolvable:$true] %s695
          %s697 = sshll.u32 %s694, 4
          %s698 = int_to_ptr.hbm [resolvable:$true] %s697
          %703 = dma.vmem_to_hbm [thread:$0]  %s696, 512, %s698, %s657, 64, 64, 4
        $region52: #{tpu_custom_call.1} parent=31 // pred_fallthru
          _
        // Predicated region
        $region53: #{tpu_custom_call.1} parent=31 // pred_check
          %p704 = pneg %p185
        $region54: #{tpu_custom_call.1} parent=31 // pred_check_branch
          %706 = sbr.rel (%p704) target = $region56
        $region55: #{tpu_custom_call.1} parent=31 // pred_region
          %s707 = smul.u32 8, %s32
          %709 = vsyncadd %s662, 0
          %s710 = smul.addr %s31, 8
          %s711 = sadd.s32 %s707, %s710
          %s712 = smul.addr %s711, 4
          %s713 = scalar_lea.hbm %s5, %s712
          %s714 = sshll.u32 %s665, 4
          %s715 = int_to_ptr.vmem [resolvable:$true] %s714
          %s716 = sshll.u32 %s713, 4
          %s717 = int_to_ptr.hbm [resolvable:$true] %s716
          %722 = dma.vmem_to_hbm [thread:$0]  %s715, 512, %s717, %s662, 64, 64, 4
        $region56: #{tpu_custom_call.1} parent=31 // pred_fallthru
          _
      $region32: #{tpu_custom_call.1} parent=5 // pred_fallthru
        _
      %p723 = scmp.le.s32.totalorder 2, %s22
      // Predicated region
      $region57: #{tpu_custom_call.1} parent=5 // pred_check
        %p724 = pneg %p723
      $region58: #{tpu_custom_call.1} parent=5 // pred_check_branch
        %726 = sbr.rel (%p724) target = $region60
      $region59: #{tpu_custom_call.1} parent=5 // pred_region
        %s727 = ssub.s32 %s22, 2
        // Predicated region
        $region61: #{tpu_custom_call.1} parent=59 // pred_check
          %p728 = pneg %p135
        $region62: #{tpu_custom_call.1} parent=59 // pred_check_branch
          %730 = sbr.rel (%p728) target = $region64
        $region63: #{tpu_custom_call.1} parent=59 // pred_region
          %s731 = sand.u32 %s120, 1
          %s732 = scalar_lea.sflag [#allocation4], %s731
          %s733 = sand.u32 %s120, 1
          %s734 = smul.addr %s733, 32
          %s735 = scalar_lea.vmem [#allocation8], %s734
          %737 = dma.done %s732, 512
        $region64: #{tpu_custom_call.1} parent=59 // pred_fallthru
          _
        // Predicated region
        $region65: #{tpu_custom_call.1} parent=59 // pred_check
          %p738 = pneg %p163
        $region66: #{tpu_custom_call.1} parent=59 // pred_check_branch
          %740 = sbr.rel (%p738) target = $region68
        $region67: #{tpu_custom_call.1} parent=59 // pred_region
          %s741 = sand.u32 %s28, 1
          %s742 = scalar_lea.sflag [#allocation10], %s741
          %s743 = sand.u32 %s148, 1
          %s744 = smul.addr %s743, 32
          %s745 = scalar_lea.vmem [#allocation9], %s744
          %747 = dma.done %s742, 512
        $region68: #{tpu_custom_call.1} parent=59 // pred_fallthru
          _
        // Predicated region
        $region69: #{tpu_custom_call.1} parent=59 // pred_check
          %p748 = pneg %p191
        $region70: #{tpu_custom_call.1} parent=59 // pred_check_branch
          %750 = sbr.rel (%p748) target = $region72
        $region71: #{tpu_custom_call.1} parent=59 // pred_region
          %s751 = sand.u32 %s28, 1
          %s752 = scalar_lea.sflag [#allocation10], %s751
          %s753 = sand.u32 %s176, 1
          %s754 = smul.addr %s753, 32
          %s755 = scalar_lea.vmem [#allocation11], %s754
          %757 = dma.done %s752, 512
        $region72: #{tpu_custom_call.1} parent=59 // pred_fallthru
          _
      $region60: #{tpu_custom_call.1} parent=5 // pred_fallthru
        _
    $region6: #{tpu_custom_call.1} parent=1 // loop_footer
      %s26 = sadd.s32 1, %s22
    $region7: #{tpu_custom_call.1} parent=1 // loop_footer_branch
      %21 = sbr.rel target = $region3
    $region8: #{tpu_custom_call.1} parent=1 // loop_exit
      _
    %758 = vsyncpa [#allocation3], 1
    %s759 = scalar_lea.sflag [#allocation3], 1
    %760 = vsyncpa %s759, 1
    %761 = vsyncpa [#allocation6], 1
    %762 = vsyncpa [#allocation4], 1
    %s763 = scalar_lea.sflag [#allocation4], 1
    %764 = vsyncpa %s763, 1
    %765 = vsyncpa [#allocation10], 1
    %s766 = scalar_lea.sflag [#allocation10], 1
    %767 = vsyncpa %s766, 1

</llo_original>
